<compile_context>
chip_gen: v6e
topology: v6e:2x2x1
jax: 0.10.0
libtpu: 0.0.40
codegen_flags: <defaults>
</compile_context>

<pallas_src>
import functools

import jax
import jax.numpy as jnp
from jax import lax
from jax.experimental import pallas as pl
from jax.experimental.pallas import tpu as pltpu

_LANES = 128


def _refpnts_kernel(m_ref, out_ref, *, H, W, TR):
    # m_ref:   SMEM (B*9,)            flattened row-major 3x3 matrices
    # out_ref: VMEM (1, 2, TR, 128)   one (batch, row-block) output tile
    b = pl.program_id(0)
    rblk = pl.program_id(1)

    row_i = lax.broadcasted_iota(jnp.int32, (TR, _LANES), 0)
    col_i = lax.broadcasted_iota(jnp.int32, (TR, _LANES), 1)

    if W == _LANES:
        # One image row per sublane row: no linear index needed at all.
        row = (row_i + rblk * TR).astype(jnp.float32)
        col = col_i.astype(jnp.float32)
    elif (W & (W - 1)) == 0:
        # Power-of-two W: exact integer shift/mask reconstruction.
        shift = W.bit_length() - 1
        lin = rblk * (TR * _LANES) + row_i * _LANES + col_i
        row = (lin >> shift).astype(jnp.float32)
        col = (lin & (W - 1)).astype(jnp.float32)
    else:
        # Fallback: float floor (fine for realistic IPM sizes, lin < 2^18).
        lin = (rblk * (TR * _LANES) + row_i * _LANES + col_i).astype(jnp.float32)
        row = jnp.floor(lin / float(W))
        col = lin - row * float(W)

    x = col * (1.0 / float(W))          # base_grid[..., 0]  (w / W)
    y = row * (1.0 / float(H))          # base_grid[..., 1]  (h / H)

    # Scalar weights for this batch element, read from SMEM.
    m = [m_ref[9 * b + k] for k in range(9)]
    gx = x * m[0] + y * m[1] + m[2]     # row 0 of M  (z == 1)
    gy = x * m[3] + y * m[4] + m[5]     # row 1 of M
    gz = x * m[6] + y * m[7] + m[8]     # row 2 of M

    # EUP approx reciprocal + one Newton-Raphson step (~1e-8 rel error).
    inv = pl.reciprocal(gz, approx=True)
    inv = inv * (2.0 - gz * inv)

    out_ref[0, 0, :, :] = gx * inv      # unmasked lane-dense stores,
    out_ref[0, 1, :, :] = gy * inv      # no concat/reshape copies


def make_ref_pnts_generator(size_ipm):
    """Returns forward(M) reproducing RefPntsNoGradGenerator.forward."""
    H, W = size_ipm
    HW = H * W
    R = pl.cdiv(HW, _LANES)             # sublane rows of the lane-dense layout
    R8 = pl.cdiv(R, 8) * 8              # pad sublanes to a multiple of 8
    TR = min(R8, 512)                   # row-block size per grid step (mult of 8)
    NR = pl.cdiv(R8, TR)
    R_pad = NR * TR
    L = R_pad * _LANES                  # padded flattened grid size

    def forward(M, layout="torch"):
        B = M.shape[0]
        m_flat = M.astype(jnp.float32).reshape(B * 9)

        cost = pl.CostEstimate(
            flops=14 * B * HW,
            transcendentals=B * HW,
            bytes_accessed=8 * B * HW + 36 * B,
        )

        out4 = pl.pallas_call(
            functools.partial(_refpnts_kernel, H=H, W=W, TR=TR),
            out_shape=jax.ShapeDtypeStruct((B, 2, R_pad, _LANES), jnp.float32),
            grid=(B, NR),
            in_specs=[pl.BlockSpec(memory_space=pltpu.MemorySpace.SMEM)],
            out_specs=pl.BlockSpec((1, 2, TR, _LANES),
                                   lambda b, r: (b, 0, r, 0)),
            compiler_params=pltpu.CompilerParams(
                dimension_semantics=("parallel", "parallel")),
            cost_estimate=cost,
        )(m_flat)

        chan_major_padded = out4.reshape(B, 2, L)      # lane-dense slab
        if layout == "channel_major_padded":
            # Preferred for downstream kernels: no slice, no transpose.
            # NOTE: indices >= H*W are padding (may contain inf/nan).
            return chan_major_padded
        chan_major = (chan_major_padded if L == HW
                      else chan_major_padded[:, :, :HW])
        if layout == "channel_major":
            return chan_major                           # (B, 2, HW)
        # PyTorch output convention (B, H*W, 2). The last-dim-2 transpose is a
        # separate memory-bound XLA op; prefer the channel_major layouts.
        return jnp.transpose(chan_major, (0, 2, 1))

    return forward


if __name__ == "__main__":
    key = jax.random.PRNGKey(0)
    B, H, W = 2, 16, 16

    # Deterministic example transforms: near-identity homographies so the
    # perspective denominator stays well away from zero.
    M = (jnp.eye(3, dtype=jnp.float32)[None, :, :]
         + 0.1 * jax.random.normal(key, (B, 3, 3), dtype=jnp.float32))

    forward = make_ref_pnts_generator((H, W))
    grid = jax.block_until_ready(forward(M))                       # (B, HW, 2)
    grid_cm = jax.block_until_ready(forward(M, "channel_major"))   # (B, 2, HW)

    # pure-JAX reference mirroring the PyTorch forward
    lin_w = jnp.linspace(0.0, 1.0 - 1.0 / W, W, dtype=jnp.float32)
    lin_h = jnp.linspace(0.0, 1.0 - 1.0 / H, H, dtype=jnp.float32)
    base = jnp.stack(
        [jnp.broadcast_to(lin_w[None, :], (H, W)),
         jnp.broadcast_to(lin_h[:, None], (H, W)),
         jnp.ones((H, W), jnp.float32)], axis=-1).reshape(H * W, 3)
    ref = jnp.matmul(base, jnp.transpose(M, (0, 2, 1)))
    ref = ref[:, :, 0:2] / ref[:, :, 2:]

    assert grid.shape == (B, H * W, 2), grid.shape
    assert grid.dtype == jnp.float32
    assert jnp.allclose(grid, ref, atol=1e-4, rtol=1e-4)
    assert grid_cm.shape == (B, 2, H * W), grid_cm.shape
    assert jnp.allclose(grid_cm, jnp.transpose(ref, (0, 2, 1)),
                        atol=1e-4, rtol=1e-4)
    print("KERNEL_OK")
</pallas_src>

<mosaic_0001>
module attributes {stable_mosaic.version = 11 : i64} {
  func.func @_refpnts_kernel(%arg0: i32, %arg1: i32, %arg2: memref<18xf32, #tpu.memory_space<smem>>, %arg3: memref<1x2x8x128xf32, #tpu.memory_space<vmem>>) attributes {dimension_semantics = [#tpu.dimension_semantics<parallel>, #tpu.dimension_semantics<parallel>], iteration_bounds = array<i64: 2, 1>, scalar_prefetch = 0 : i64, scratch_operands = 0 : i64, tpu.core_type = #tpu.core_type<tc>, window_params = [{transform_indices = @transform_0, window_bounds = array<i64: 18>}, {transform_indices = @transform_1, window_bounds = array<i64: 1, 2, 8, 128>}]} {
    %0 = tpu.iota {dimensions = array<i32: 0>} : vector<8x128xi32>
    %1 = tpu.iota {dimensions = array<i32: 1>} : vector<8x128xi32>
    %c1024_i32 = arith.constant 1024 : i32
    %2 = arith.muli %arg1, %c1024_i32 : i32
    %c128_i32 = arith.constant 128 : i32
    %3 = vector.broadcast %c128_i32 : i32 to vector<8x128xi32>
    %4 = arith.muli %0, %3 : vector<8x128xi32>
    %5 = vector.broadcast %2 : i32 to vector<8x128xi32>
    %6 = arith.addi %5, %4 : vector<8x128xi32>
    %7 = arith.addi %6, %1 : vector<8x128xi32>
    %c4_i32 = arith.constant 4 : i32
    %8 = vector.broadcast %c4_i32 : i32 to vector<8x128xi32>
    %9 = arith.shrsi %7, %8 : vector<8x128xi32>
    %10 = arith.sitofp %9 : vector<8x128xi32> to vector<8x128xf32>
    %c15_i32 = arith.constant 15 : i32
    %11 = vector.broadcast %c15_i32 : i32 to vector<8x128xi32>
    %12 = arith.andi %7, %11 : vector<8x128xi32>
    %13 = arith.sitofp %12 : vector<8x128xi32> to vector<8x128xf32>
    %cst = arith.constant 6.250000e-02 : f32
    %14 = vector.broadcast %cst : f32 to vector<8x128xf32>
    %15 = arith.mulf %13, %14 : vector<8x128xf32>
    %cst_0 = arith.constant 6.250000e-02 : f32
    %16 = vector.broadcast %cst_0 : f32 to vector<8x128xf32>
    %17 = arith.mulf %10, %16 : vector<8x128xf32>
    %c9_i32 = arith.constant 9 : i32
    %18 = arith.muli %c9_i32, %arg0 : i32
    %c0_i32 = arith.constant 0 : i32
    %19 = arith.addi %18, %c0_i32 : i32
    %20 = arith.index_cast %19 : i32 to index
    %21 = memref.load %arg2[%20] : memref<18xf32, #tpu.memory_space<smem>>
    %c9_i32_1 = arith.constant 9 : i32
    %22 = arith.muli %c9_i32_1, %arg0 : i32
    %c1_i32 = arith.constant 1 : i32
    %23 = arith.addi %22, %c1_i32 : i32
    %24 = arith.index_cast %23 : i32 to index
    %25 = memref.load %arg2[%24] : memref<18xf32, #tpu.memory_space<smem>>
    %c9_i32_2 = arith.constant 9 : i32
    %26 = arith.muli %c9_i32_2, %arg0 : i32
    %c2_i32 = arith.constant 2 : i32
    %27 = arith.addi %26, %c2_i32 : i32
    %28 = arith.index_cast %27 : i32 to index
    %29 = memref.load %arg2[%28] : memref<18xf32, #tpu.memory_space<smem>>
    %c9_i32_3 = arith.constant 9 : i32
    %30 = arith.muli %c9_i32_3, %arg0 : i32
    %c3_i32 = arith.constant 3 : i32
    %31 = arith.addi %30, %c3_i32 : i32
    %32 = arith.index_cast %31 : i32 to index
    %33 = memref.load %arg2[%32] : memref<18xf32, #tpu.memory_space<smem>>
    %c9_i32_4 = arith.constant 9 : i32
    %34 = arith.muli %c9_i32_4, %arg0 : i32
    %c4_i32_5 = arith.constant 4 : i32
    %35 = arith.addi %34, %c4_i32_5 : i32
    %36 = arith.index_cast %35 : i32 to index
    %37 = memref.load %arg2[%36] : memref<18xf32, #tpu.memory_space<smem>>
    %c9_i32_6 = arith.constant 9 : i32
    %38 = arith.muli %c9_i32_6, %arg0 : i32
    %c5_i32 = arith.constant 5 : i32
    %39 = arith.addi %38, %c5_i32 : i32
    %40 = arith.index_cast %39 : i32 to index
    %41 = memref.load %arg2[%40] : memref<18xf32, #tpu.memory_space<smem>>
    %c9_i32_7 = arith.constant 9 : i32
    %42 = arith.muli %c9_i32_7, %arg0 : i32
    %c6_i32 = arith.constant 6 : i32
    %43 = arith.addi %42, %c6_i32 : i32
    %44 = arith.index_cast %43 : i32 to index
    %45 = memref.load %arg2[%44] : memref<18xf32, #tpu.memory_space<smem>>
    %c9_i32_8 = arith.constant 9 : i32
    %46 = arith.muli %c9_i32_8, %arg0 : i32
    %c7_i32 = arith.constant 7 : i32
    %47 = arith.addi %46, %c7_i32 : i32
    %48 = arith.index_cast %47 : i32 to index
    %49 = memref.load %arg2[%48] : memref<18xf32, #tpu.memory_space<smem>>
    %c9_i32_9 = arith.constant 9 : i32
    %50 = arith.muli %c9_i32_9, %arg0 : i32
    %c8_i32 = arith.constant 8 : i32
    %51 = arith.addi %50, %c8_i32 : i32
    %52 = arith.index_cast %51 : i32 to index
    %53 = memref.load %arg2[%52] : memref<18xf32, #tpu.memory_space<smem>>
    %54 = vector.broadcast %21 : f32 to vector<8x128xf32>
    %55 = arith.mulf %15, %54 : vector<8x128xf32>
    %56 = vector.broadcast %25 : f32 to vector<8x128xf32>
    %57 = arith.mulf %17, %56 : vector<8x128xf32>
    %58 = arith.addf %55, %57 : vector<8x128xf32>
    %59 = vector.broadcast %29 : f32 to vector<8x128xf32>
    %60 = arith.addf %58, %59 : vector<8x128xf32>
    %61 = vector.broadcast %33 : f32 to vector<8x128xf32>
    %62 = arith.mulf %15, %61 : vector<8x128xf32>
    %63 = vector.broadcast %37 : f32 to vector<8x128xf32>
    %64 = arith.mulf %17, %63 : vector<8x128xf32>
    %65 = arith.addf %62, %64 : vector<8x128xf32>
    %66 = vector.broadcast %41 : f32 to vector<8x128xf32>
    %67 = arith.addf %65, %66 : vector<8x128xf32>
    %68 = vector.broadcast %45 : f32 to vector<8x128xf32>
    %69 = arith.mulf %15, %68 : vector<8x128xf32>
    %70 = vector.broadcast %49 : f32 to vector<8x128xf32>
    %71 = arith.mulf %17, %70 : vector<8x128xf32>
    %72 = arith.addf %69, %71 : vector<8x128xf32>
    %73 = vector.broadcast %53 : f32 to vector<8x128xf32>
    %74 = arith.addf %72, %73 : vector<8x128xf32>
    %75 = tpu.reciprocal %74 {approx = true} : vector<8x128xf32> -> vector<8x128xf32>
    %76 = arith.mulf %74, %75 : vector<8x128xf32>
    %cst_10 = arith.constant 2.000000e+00 : f32
    %77 = vector.broadcast %cst_10 : f32 to vector<8x128xf32>
    %78 = arith.subf %77, %76 : vector<8x128xf32>
    %79 = arith.mulf %75, %78 : vector<8x128xf32>
    %80 = arith.mulf %60, %79 : vector<8x128xf32>
    %c0 = arith.constant 0 : index
    %c0_11 = arith.constant 0 : index
    %c0_12 = arith.constant 0 : index
    %c0_13 = arith.constant 0 : index
    %81 = vector.load %arg3[%c0, %c0_11, %c0_12, %c0_13] : memref<1x2x8x128xf32, #tpu.memory_space<vmem>>, vector<1x1x8x128xf32>
    %82 = vector.shape_cast %81 : vector<1x1x8x128xf32> to vector<8x128xf32>
    %83 = vector.shape_cast %80 : vector<8x128xf32> to vector<1x1x8x128xf32>
    tpu.vector_store %arg3[%c0, %c0_11, %c0_12, %c0_13], %83 {strides = array<i32>} : memref<1x2x8x128xf32, #tpu.memory_space<vmem>>, vector<1x1x8x128xf32>,
    %84 = arith.mulf %67, %79 : vector<8x128xf32>
    %c0_14 = arith.constant 0 : index
    %c1 = arith.constant 1 : index
    %c0_15 = arith.constant 0 : index
    %c0_16 = arith.constant 0 : index
    %85 = vector.load %arg3[%c0_14, %c1, %c0_15, %c0_16] : memref<1x2x8x128xf32, #tpu.memory_space<vmem>>, vector<1x1x8x128xf32>
    %86 = vector.shape_cast %85 : vector<1x1x8x128xf32> to vector<8x128xf32>
    %87 = vector.shape_cast %84 : vector<8x128xf32> to vector<1x1x8x128xf32>
    tpu.vector_store %arg3[%c0_14, %c1, %c0_15, %c0_16], %87 {strides = array<i32>} : memref<1x2x8x128xf32, #tpu.memory_space<vmem>>, vector<1x1x8x128xf32>,
    return
  }
  func.func @transform_0(%arg0: i32, %arg1: i32) -> i32 {
    %c0_i32 = arith.constant 0 : i32
    %c0_i32_0 = arith.constant 0 : i32
    return %c0_i32 : i32
  }
  func.func @transform_1(%arg0: i32, %arg1: i32) -> (i32, i32, i32, i32) {
    %c0_i32 = arith.constant 0 : i32
    %c0_i32_0 = arith.constant 0 : i32
    %c0_i32_1 = arith.constant 0 : i32
    return %arg0, %c0_i32, %arg1, %c0_i32_0 : i32, i32, i32, i32
  }
}

</mosaic_0001>

<llo_original>
// kernel: tpu_custom_call.1
$region0: #{tpu_custom_call.1}
  #allocation0 [shape = 'u32[]', space=smem, size = 0x4, offset = 0x4, fixed_abs, tag = 'smem constant byte address 0x4 - core index']
  #allocation1 [shape = 'u32[144,128]{1,0:T(1,128)}', space=vmem, size = 0x12000, scoped, tag = 'internal scratch']
  %s0 = inlined_call_operand.hbm [shape: f32[18], index: 0, kind: input, shape index: {}]
  %s1 = inlined_call_operand.hbm [shape: f32[2,2,8,128], index: 1, kind: output, shape index: {}]
  %s2 = sld [smem:[#allocation0]]
  $region41: #{tpu_custom_call.1} parent=0
    _
  %s4 = ssub.s32 1, %s2
  %s5 = scalar_select 0, %s4, %s2
  $region1: #{tpu_custom_call.1} parent=0
    #allocation2 [shape = 'u8[512]{0}', space=smem, size = 0x200, scoped, tag = 'input window, operand 0, single buffered']
    #allocation3 [shape = 's32[2]{0}', space=sflag, size = 0x8, scoped, tag = 'scoped memory for tpu_custom_call.1']
    #allocation4 [shape = 's32[2]{0}', space=sflag, size = 0x8, scoped, tag = 'scoped memory for tpu_custom_call.1']
    #allocation5 [shape = 'u8[16384]{0}', space=vmem, size = 0x4000, scoped, tag = 'output window, operand 0']
    %6 = vsyncpa [#allocation4], 0
    %7 = vsyncpa [#allocation3], 0
    %s8 = scalar_lea.sflag [#allocation3], 1
    %9 = vsyncpa %s8, 0
    loop: start=0, step=1, limit=4
    $region2: #{tpu_custom_call.1} parent=1 // loop_pre_header
      _
    $region3: #{tpu_custom_call.1} parent=1 // loop_header
      %s11 = sphi 0, %s15
      %p12 = scmp.ge.s32.totalorder %s11, 4
      %s18 = sphi 0, %s30
      %s19 = sphi 0, %s26
      %s20 = sphi 0, %s18
      %s21 = sphi 0, %s19
      %s22 = sphi 0, %s20
      %s23 = sphi 0, %s21
      %s31 = sphi 0, %s31
      %s33 = sphi 0, %s31
      %s34 = sphi 0, %s33
      %s48 = sphi 0, %s34
      %s56 = sphi 0, %s58
      %s59 = sphi 0, %s56
      %s60 = sphi 0, %s59
      %s76 = sphi 0, %s60
    $region4: #{tpu_custom_call.1} parent=1 // loop_header_branch
      %14 = sbr.rel (%p12) target = $region8
    $region5: #{tpu_custom_call.1} parent=1 // loop_body
      %s16 = ssub.s32 %s11, 1
      %s17 = ssub.s32 %s11, 2
      %s24 = sadd.s32 1, %s19
      %p25 = scmp.ge.s32.totalorder %s24, 1
      %s26 = scalar_select %p25, 0, %s24
      %s27 = sadd.s32 1, %s18
      %s28 = scalar_select %p25, %s27, %s18
      %p29 = scmp.ge.s32.totalorder %s28, 2
      %s30 = scalar_select %p29, 0, %s28
      %s32 = sadd.s32 %s31, 1
      %p35 = scmp.eq.s32.totalorder %s11, 1
      %p36 = scmp.ne.s32.totalorder %s31, %s33
      %p37 = scmp.eq.s32.totalorder %s11, 0
      %p38 = por %p36, %p37
      %p39 = scmp.ne.s32.totalorder %s31, %s33
      %p40 = scmp.eq.s32.totalorder %s16, 1
      %p41 = por %p39, %p40
      %p42 = scmp.ne.s32.totalorder %s33, %s34
      %p43 = scmp.eq.s32.totalorder %s16, 0
      %p44 = por %p42, %p43
      %p45 = scmp.ne.s32.totalorder %s33, %s34
      %p46 = scmp.eq.s32.totalorder %s17, 1
      %p47 = por %p45, %p46
      %p49 = scmp.ne.s32.totalorder %s34, %s48
      %p50 = scmp.eq.s32.totalorder %s17, 0
      %p51 = por %p49, %p50
      %s52 = ssub.s32 %s18, %s30
      %s53 = ssub.s32 %s19, %s26
      %s54 = sor.u32 %s52, %s53
      %p55 = scmp.eq.s32.totalorder %s54, 0
      %s57 = sadd.s32 %s56, 1
      %s58 = scalar_select %p55, %s56, %s57
      %p61 = pneg %p55
      %p62 = scmp.eq.s32.totalorder %s11, 1
      %p63 = por %p61, %p62
      %p64 = scmp.ne.s32.totalorder %s56, %s59
      %p65 = scmp.eq.s32.totalorder %s11, 0
      %p66 = por %p64, %p65
      %p67 = scmp.ne.s32.totalorder %s56, %s59
      %p68 = scmp.eq.s32.totalorder %s16, 1
      %p69 = por %p67, %p68
      %p70 = scmp.ne.s32.totalorder %s59, %s60
      %p71 = scmp.eq.s32.totalorder %s16, 0
      %p72 = por %p70, %p71
      %p73 = scmp.ne.s32.totalorder %s59, %s60
      %p74 = scmp.eq.s32.totalorder %s17, 1
      %p75 = por %p73, %p74
      %p77 = scmp.ne.s32.totalorder %s60, %s76
      %p78 = scmp.eq.s32.totalorder %s17, 0
      %p79 = por %p77, %p78
      %p80 = scmp.le.s32.totalorder 1, %s11
      %p81 = scmp.lt.s32.totalorder %s11, 3
      %p82 = pnand %p80, %p81
      %p83 = pneg %p82
      // Predicated region
      $region9: #{tpu_custom_call.1} parent=5 // pred_check
        _
      $region10: #{tpu_custom_call.1} parent=5 // pred_check_branch
        %85 = sbr.rel (%p82) target = $region12
      $region11: #{tpu_custom_call.1} parent=5 // pred_region
        %s86 = ssub.s32 %s11, 1
        // Predicated region
        $region13: #{tpu_custom_call.1} parent=11 // pred_check
          %p87 = pneg %p44
        $region14: #{tpu_custom_call.1} parent=11 // pred_check_branch
          %89 = sbr.rel (%p87) target = $region16
        $region15: #{tpu_custom_call.1} parent=11 // pred_region
          %s91 = ssub.s32 16, 16
          %92 = vsyncadd [#allocation4], %s91
          %95 = dma.hbm_to_smem %s0, 16, [#allocation2], [#allocation4]
        $region16: #{tpu_custom_call.1} parent=11 // pred_fallthru
          _
      $region12: #{tpu_custom_call.1} parent=5 // pred_fallthru
        _
      %p96 = scmp.lt.s32.totalorder %s11, 2
      // Predicated region
      $region17: #{tpu_custom_call.1} parent=5 // pred_check
        %p97 = pneg %p96
      $region18: #{tpu_custom_call.1} parent=5 // pred_check_branch
        %99 = sbr.rel (%p97) target = $region20
      $region19: #{tpu_custom_call.1} parent=5 // pred_region
        _
      $region20: #{tpu_custom_call.1} parent=5 // pred_fallthru
        _
      %p100 = scmp.le.s32.totalorder 1, %s11
      %p101 = scmp.lt.s32.totalorder %s11, 3
      %p102 = pnand %p100, %p101
      %p103 = pneg %p102
      // Predicated region
      $region21: #{tpu_custom_call.1} parent=5 // pred_check
        _
      $region22: #{tpu_custom_call.1} parent=5 // pred_check_branch
        %105 = sbr.rel (%p102) target = $region24
      $region23: #{tpu_custom_call.1} parent=5 // pred_region
        %s106 = ssub.s32 %s11, 1
        // Predicated region
        $region25: #{tpu_custom_call.1} parent=23 // pred_check
          %p107 = pneg %p44
        $region26: #{tpu_custom_call.1} parent=23 // pred_check_branch
          %109 = sbr.rel (%p107) target = $region28
        $region27: #{tpu_custom_call.1} parent=23 // pred_region
          %110 = dma.done [#allocation4], 16
        $region28: #{tpu_custom_call.1} parent=23 // pred_fallthru
          _
        %111 = sfence
        %p112 = pneg %p44
        %p113 = pneg %p41
        %p114 = pneg %p72
        %p115 = pneg %p69
        %s116 = sand.u32 %s59, 1
        %s117 = scalar_lea.sflag [#allocation3], %s116
        %s118 = sand.u32 %s59, 1
        %s119 = smul.addr %s118, 16
        %s120 = scalar_lea.vmem [#allocation5], %s119
        %v121 = vlaneseq
        %v122 = vshrl.u32 %v121, 7
        %v123 = vlaneseq
        %v124 = vand.u32 %v123, 127
        %s125 = smul.u32 %s21, 1024
        %v126 = vmul.u32 %v122, 128
        %v127 = vstv %s125
        %v128 = vadd.s32 %v127, %v126
        %v129 = vadd.s32 %v128, %v124
        %v130 = vshra.s32 %v129, 4
        %v131 = vcvt.s32.f32 %v130
        %v132 = vand.u32 %v129, 15
        %v133 = vcvt.s32.f32 %v132
        %v134 = vmul.f32 %v133, 0.0625
        %v135 = vmul.f32 %v131, 0.0625
        %s136 = smul.u32 %s20, 9
        %s137 = sld [smem:[#allocation2 + %s136]]
        %s138 = sadd.s32 %s136, 1
        %s139 = sld [smem:[#allocation2 + %s138]]
        %s140 = sadd.s32 %s136, 2
        %s141 = sld [smem:[#allocation2 + %s140]]
        %s142 = sadd.s32 %s136, 3
        %s143 = sld [smem:[#allocation2 + %s142]]
        %s144 = sadd.s32 %s136, 4
        %s145 = sld [smem:[#allocation2 + %s144]]
        %s146 = sadd.s32 %s136, 5
        %s147 = sld [smem:[#allocation2 + %s146]]
        %s148 = sadd.s32 %s136, 6
        %s149 = sld [smem:[#allocation2 + %s148]]
        %s150 = sadd.s32 %s136, 7
        %s151 = sld [smem:[#allocation2 + %s150]]
        %s152 = sadd.s32 %s136, 8
        %s153 = sld [smem:[#allocation2 + %s152]]
        %v154 = vstv %s137
        %v155 = vmul.f32 %v134, %v154
        %v156 = vstv %s139
        %v157 = vmul.f32 %v135, %v156
        %v158 = vadd.f32 %v155, %v157
        %v159 = vstv %s141
        %v160 = vadd.f32 %v158, %v159
        %v161 = vstv %s143
        %v162 = vmul.f32 %v134, %v161
        %v163 = vstv %s145
        %v164 = vmul.f32 %v135, %v163
        %v165 = vadd.f32 %v162, %v164
        %v166 = vstv %s147
        %v167 = vadd.f32 %v165, %v166
        %v168 = vstv %s149
        %v169 = vmul.f32 %v134, %v168
        %v170 = vstv %s151
        %v171 = vmul.f32 %v135, %v170
        %v172 = vadd.f32 %v169, %v171
        %v173 = vstv %s153
        %v174 = vadd.f32 %v172, %v173
        %v175 = vrcp.pop %v174
        %v176 = vmul.f32 %v174, %v175
        %v177 = vsub.f32 2.0, %v176
        %v178 = vmul.f32 %v175, %v177
        %v179 = vmul.f32 %v160, %v178
        %180 = vst [vmem:[%s120] sm:$0xff] %v179
        %v181 = vmul.f32 %v167, %v178
        %s182 = scalar_lea.vmem %s120, 8 [#allocation5]
        %183 = vst [vmem:[%s182] sm:$0xff] %v181
        %s184 = sand.u32 %s59, 1
        %s185 = scalar_lea.sflag [#allocation3], %s184
        %s186 = sand.u32 %s59, 1
        %s187 = smul.addr %s186, 16
        %s188 = scalar_lea.vmem [#allocation5], %s187
        // Predicated region
        $region29: #{tpu_custom_call.1} parent=23 // pred_check
          %p189 = pneg %p69
        $region30: #{tpu_custom_call.1} parent=23 // pred_check_branch
          %191 = sbr.rel (%p189) target = $region32
        $region31: #{tpu_custom_call.1} parent=23 // pred_region
          %s193 = ssub.s32 256, 256
          %194 = vsyncadd %s185, %s193
          %s195 = smul.addr %s20, 2
          %s196 = sadd.s32 %s21, %s195
          %s197 = smul.addr %s196, 128
          %s198 = scalar_lea.hbm %s1, %s197
          %s199 = sshll.u32 %s188, 4
          %s200 = int_to_ptr.vmem [resolvable:$true] %s199
          %205 = dma.vmem_to_hbm [thread:$0]  %s200, 256, %s198, %s185, 128, 128, 8
        $region32: #{tpu_custom_call.1} parent=23 // pred_fallthru
          _
      $region24: #{tpu_custom_call.1} parent=5 // pred_fallthru
        _
      %p206 = scmp.le.s32.totalorder 2, %s11
      // Predicated region
      $region33: #{tpu_custom_call.1} parent=5 // pred_check
        %p207 = pneg %p206
      $region34: #{tpu_custom_call.1} parent=5 // pred_check_branch
        %209 = sbr.rel (%p207) target = $region36
      $region35: #{tpu_custom_call.1} parent=5 // pred_region
        %s210 = ssub.s32 %s11, 2
        // Predicated region
        $region37: #{tpu_custom_call.1} parent=35 // pred_check
          %p211 = pneg %p75
        $region38: #{tpu_custom_call.1} parent=35 // pred_check_branch
          %213 = sbr.rel (%p211) target = $region40
        $region39: #{tpu_custom_call.1} parent=35 // pred_region
          %s214 = sand.u32 %s60, 1
          %s215 = scalar_lea.sflag [#allocation3], %s214
          %s216 = sand.u32 %s60, 1
          %s217 = smul.addr %s216, 16
          %s218 = scalar_lea.vmem [#allocation5], %s217
          %219 = dma.done %s215, 256
        $region40: #{tpu_custom_call.1} parent=35 // pred_fallthru
          _
      $region36: #{tpu_custom_call.1} parent=5 // pred_fallthru
        _
    $region6: #{tpu_custom_call.1} parent=1 // loop_footer
      %s15 = sadd.s32 1, %s11
    $region7: #{tpu_custom_call.1} parent=1 // loop_footer_branch
      %10 = sbr.rel target = $region3
    $region8: #{tpu_custom_call.1} parent=1 // loop_exit
      _
    %220 = vsyncpa [#allocation3], 1
    %s221 = scalar_lea.sflag [#allocation3], 1
    %222 = vsyncpa %s221, 1
    %223 = vsyncpa [#allocation4], 1
    %s224 = scalar_lea.sflag [#allocation4], 1
    %225 = vsyncpa %s224, 1

</llo_original>
